<compile_context>
chip_gen: v7x
topology: tpu7x:2x2x1
jax: 0.10.0
libtpu: 0.0.40
codegen_flags: <defaults>
</compile_context>

<pallas_src>
from typing import Dict, List, NamedTuple, Tuple

import jax
import jax.numpy as jnp
from jax.experimental import pallas as pl
from jax.experimental.pallas import tpu as pltpu

MAX_ROWS_PER_STEP = 256    # rows gathered per grid step (amortizes ~0.35us/step overhead)
MAX_IDS_PER_CALL = 65536   # cap scalar-prefetch SMEM footprint (int32 -> <=256 KiB per call)


def _round_up(x: int, m: int) -> int:
    return ((x + m - 1) // m) * m


def _make_gather_kernel(tb: int):
    """Build a kernel that gathers `tb` embedding rows per grid step via DMA."""

    def kernel(ids_ref, table_ref, out_ref, sem):
        # ids_ref   : SMEM (n_pad,) int32 row ids (scalar prefetch, drives DMA addressing)
        # table_ref : HBM  (V, D) embedding table (memory_space=pl.ANY, never fully in VMEM)
        # out_ref   : VMEM (tb, D) output block for this grid step
        # sem       : (1,) DMA semaphore shared by all in-flight row copies
        base = pl.multiple_of(pl.program_id(0) * tb, tb)   # hoisted scalar index math

        # Issue all `tb` row DMAs before waiting on any, so they overlap each
        # other (and the pipeline's output write-back of the previous block).
        @pl.loop(0, tb)
        def _start(r):
            row = ids_ref[base + r]                        # dynamic scalar read from SMEM
            pltpu.make_async_copy(
                table_ref.at[pl.ds(row, 1), :],            # (1, D) row in HBM
                out_ref.at[pl.ds(r, 1), :],                # (1, D) slot in the VMEM out block
                sem.at[0],
            ).start()

        # Drain: wait for all `tb` completions (identical transfer sizes share one sem).
        @pl.loop(0, tb)
        def _wait(r):
            pltpu.make_async_copy(
                table_ref.at[pl.ds(0, 1), :],
                out_ref.at[pl.ds(r, 1), :],
                sem.at[0],
            ).wait()

    return kernel


def _gather_call(table: jnp.ndarray, ids_chunk: jnp.ndarray) -> jnp.ndarray:
    """One pallas_call gathering rows of `table` at `ids_chunk`."""
    V, D = table.shape
    n = int(ids_chunk.shape[0])
    tb = min(MAX_ROWS_PER_STEP, _round_up(max(n, 1), 8))   # adaptive block: small inputs stay small
    n_pad = _round_up(max(n, 1), tb)
    # Padding ids gather (valid) row 0; those rows are sliced off below.
    ids_p = jnp.pad(ids_chunk.astype(jnp.int32), (0, n_pad - n))

    out = pl.pallas_call(
        _make_gather_kernel(tb),
        out_shape=jax.ShapeDtypeStruct((n_pad, D), table.dtype),
        grid_spec=pltpu.PrefetchScalarGridSpec(
            num_scalar_prefetch=1,                          # ids land in SMEM
            grid=(n_pad // tb,),
            in_specs=[pl.BlockSpec(memory_space=pl.ANY)],   # table stays in HBM (scales to any vocab)
            out_specs=pl.BlockSpec((tb, D), lambda i, ids: (i, 0)),
            scratch_shapes=[pltpu.SemaphoreType.DMA((1,))],
        ),
        compiler_params=pltpu.CompilerParams(
            dimension_semantics=("parallel",)),             # independent steps -> v7x megacore
    )(ids_p, table)
    return out[:n]


def embedding_lookup(table: jnp.ndarray, ids: jnp.ndarray) -> jnp.ndarray:
    """Pallas DMA-gather: (V, D) HBM table, (n,) int ids -> (n, D)."""
    V, D = table.shape
    # Clamp instead of faulting: the DMA path *is* bounds-checked on TPU.
    # TODO(synk): PyTorch embedding raises on out-of-range ids; we clamp for safety.
    ids = jnp.clip(ids.astype(jnp.int32), 0, V - 1)
    n = int(ids.shape[0])
    if n == 0:
        return jnp.zeros((0, D), table.dtype)
    chunks = [
        _gather_call(table, ids[s:s + MAX_IDS_PER_CALL])
        for s in range(0, n, MAX_IDS_PER_CALL)
    ]
    return chunks[0] if len(chunks) == 1 else jnp.concatenate(chunks, axis=0)


class EmbeddingConfigLite(NamedTuple):
    table_name: str
    feature_names: Tuple[str, ...]
    dim: int
    vocab_size: int


class JaggedTensorLite(NamedTuple):
    values: jnp.ndarray   # (num_ids, dim) embeddings
    lengths: jnp.ndarray  # (batch,) int32 per-sample id counts


class ShardedEmbeddingJax:
    """Single-chip JAX/Pallas analogue of ShardedEmbedding.forward.

    # TODO(synk): distributed row-wise sharding, fused Adam/SGD optimizer state,
    # and dynamicemb eviction have no single-device forward-pass equivalent.
    """

    def __init__(self, configs: List[EmbeddingConfigLite], seed: int = 0):
        self._configs = configs
        key = jax.random.PRNGKey(seed)
        # Tables sharing an embedding dim are stacked into one (sum_vocab, dim)
        # array so all their features can be served by a single fused kernel call.
        self._stacked: Dict[int, jnp.ndarray] = {}
        self._table_meta: Dict[str, Tuple[int, int, int]] = {}  # name -> (dim, row_offset, vocab)
        self._feature_to_table: Dict[str, str] = {}
        by_dim: Dict[int, List[EmbeddingConfigLite]] = {}
        for cfg in configs:
            by_dim.setdefault(cfg.dim, []).append(cfg)
            for f in cfg.feature_names:
                self._feature_to_table[f] = cfg.table_name
        for dim, cfgs in by_dim.items():
            parts = []
            offset = 0
            for cfg in cfgs:
                key, sub = jax.random.split(key)
                parts.append(
                    jax.random.normal(sub, (cfg.vocab_size, dim), jnp.float32)
                    / jnp.sqrt(jnp.float32(dim))
                )
                self._table_meta[cfg.table_name] = (dim, offset, cfg.vocab_size)
                offset += cfg.vocab_size
            self._stacked[dim] = parts[0] if len(parts) == 1 else jnp.concatenate(parts, axis=0)

    def forward(
        self,
        kjt_values: Dict[str, jnp.ndarray],
        kjt_lengths: Dict[str, jnp.ndarray],
    ) -> Dict[str, JaggedTensorLite]:
        """kjt_values[f]: (num_ids_f,) int ids; kjt_lengths[f]: (batch,) int32."""
        out: Dict[str, JaggedTensorLite] = {}
        # Fuse all features that share an embedding dim into one pallas_call.
        feats_by_dim: Dict[int, List[str]] = {}
        for feat in kjt_values:
            dim, _, _ = self._table_meta[self._feature_to_table[feat]]
            feats_by_dim.setdefault(dim, []).append(feat)

        for dim, feats in feats_by_dim.items():
            offset_ids = []
            sizes = []
            for feat in feats:
                _, row_off, vocab = self._table_meta[self._feature_to_table[feat]]
                ids = jnp.clip(kjt_values[feat].astype(jnp.int32), 0, vocab - 1) + row_off
                offset_ids.append(ids)
                sizes.append(int(ids.shape[0]))
            all_ids = offset_ids[0] if len(offset_ids) == 1 else jnp.concatenate(offset_ids)
            emb = embedding_lookup(self._stacked[dim], all_ids)
            start = 0
            for feat, sz in zip(feats, sizes):
                out[feat] = JaggedTensorLite(values=emb[start:start + sz],
                                             lengths=kjt_lengths[feat])
                start += sz
        return out

    __call__ = forward

    def export_local_embedding(self, table_name: str):
        dim, off, vocab = self._table_meta[table_name]
        return jnp.arange(vocab), self._stacked[dim][off:off + vocab]


if __name__ == "__main__":
    configs = [
        EmbeddingConfigLite(table_name="item_table", feature_names=("item_id",),
                            dim=32, vocab_size=100),
        EmbeddingConfigLite(table_name="user_table", feature_names=("user_id",),
                            dim=32, vocab_size=64),
    ]
    emb = ShardedEmbeddingJax(configs, seed=0)

    # Small synthetic KeyedJaggedTensor: batch=2, jagged lengths per feature.
    key = jax.random.PRNGKey(0)
    k1, k2 = jax.random.split(key)
    item_lengths = jnp.array([3, 5], dtype=jnp.int32)   # total 8 ids
    user_lengths = jnp.array([2, 4], dtype=jnp.int32)   # total 6 ids
    item_ids = jax.random.randint(k1, (8,), 0, 100, jnp.int32)
    user_ids = jax.random.randint(k2, (6,), 0, 64, jnp.int32)

    kjt_values = {"item_id": item_ids, "user_id": user_ids}
    kjt_lengths = {"item_id": item_lengths, "user_id": user_lengths}

    out = emb(kjt_values, kjt_lengths)
    jax.block_until_ready({k: v.values for k, v in out.items()})

    # Correctness check against plain-JAX gather on the exported tables.
    _, item_tbl = emb.export_local_embedding("item_table")
    _, user_tbl = emb.export_local_embedding("user_table")
    ref_item = jnp.take(item_tbl, item_ids, axis=0)
    ref_user = jnp.take(user_tbl, user_ids, axis=0)
    assert out["item_id"].values.shape == (8, 32)
    assert out["user_id"].values.shape == (6, 32)
    assert jnp.allclose(out["item_id"].values, ref_item)
    assert jnp.allclose(out["user_id"].values, ref_user)
    assert jnp.array_equal(out["item_id"].lengths, item_lengths)
    assert jnp.array_equal(out["user_id"].lengths, user_lengths)

    print("KERNEL_OK")
</pallas_src>

<mosaic_0001>
module attributes {stable_mosaic.version = 11 : i64} {
  func.func @kernel(%arg0: i32, %arg1: memref<16xi32, #tpu.memory_space<smem>>, %arg2: memref<164x32xf32, #tpu.memory_space<any>>, %arg3: memref<16x32xf32, #tpu.memory_space<vmem>>, %arg4: memref<1x!tpu.dma_semaphore, #tpu.memory_space<semaphore_mem>>) attributes {dimension_semantics = [#tpu.dimension_semantics<parallel>], iteration_bounds = array<i64: 1>, scalar_prefetch = 1 : i64, scratch_operands = 1 : i64, tpu.core_type = #tpu.core_type<tc>, window_params = [{}, {transform_indices = @transform_1, window_bounds = array<i64: 16, 32>}]} {
    %c16_i32 = arith.constant 16 : i32
    %0 = arith.muli %arg0, %c16_i32 : i32
    %1 = tpu.assume_multiple %0, 16 : i32
    %c0_i32 = arith.constant 0 : i32
    %c16_i32_0 = arith.constant 16 : i32
    %2 = arith.addi %c0_i32, %c16_i32_0 : i32
    %c1_i32 = arith.constant 1 : i32
    scf.for %arg5 = %c0_i32 to %2 step %c1_i32  : i32 {
      %c1_i32_6 = arith.constant 1 : i32
      %4 = arith.muli %arg5, %c1_i32_6 : i32
      %c0_i32_7 = arith.constant 0 : i32
      %5 = arith.addi %c0_i32_7, %4 : i32
      %6 = arith.addi %1, %5 : i32
      %7 = arith.index_cast %6 : i32 to index
      %8 = memref.load %arg1[%7] : memref<16xi32, #tpu.memory_space<smem>>
      %c0_i32_8 = arith.constant 0 : i32
      %c0_i32_9 = arith.constant 0 : i32
      %9 = tpu.memref_slice %arg2[%8, %c0_i32_9] : memref<164x32xf32, #tpu.memory_space<any>> -> memref<1x32xf32, #tpu.memory_space<any>>
      %c0_i32_10 = arith.constant 0 : i32
      %10 = tpu.memref_slice %arg3[%5, %c0_i32_10] : memref<16x32xf32, #tpu.memory_space<vmem>> -> memref<1x32xf32, #tpu.memory_space<vmem>>
      %11 = tpu.memref_slice %arg4[%c0_i32_8] : memref<1x!tpu.dma_semaphore, #tpu.memory_space<semaphore_mem>> -> memref<1x!tpu.dma_semaphore, #tpu.memory_space<semaphore_mem>>
      %12 = tpu.memref_squeeze %11 : memref<1x!tpu.dma_semaphore, #tpu.memory_space<semaphore_mem>> -> memref<!tpu.dma_semaphore, #tpu.memory_space<semaphore_mem>>
      tpu.enqueue_dma source(%9 : memref<1x32xf32, #tpu.memory_space<any>>) target(%10 : memref<1x32xf32, #tpu.memory_space<vmem>>) target_semaphore(%12 : memref<!tpu.dma_semaphore, #tpu.memory_space<semaphore_mem>>)
    }
    %c16_i32_1 = arith.constant 16 : i32
    %c0_i32_2 = arith.constant 0 : i32
    %c16_i32_3 = arith.constant 16 : i32
    %3 = arith.addi %c0_i32_2, %c16_i32_3 : i32
    %c1_i32_4 = arith.constant 1 : i32
    scf.for %arg5 = %c0_i32_2 to %3 step %c1_i32_4  : i32 {
      %c1_i32_6 = arith.constant 1 : i32
      %4 = arith.muli %arg5, %c1_i32_6 : i32
      %c0_i32_7 = arith.constant 0 : i32
      %5 = arith.addi %c0_i32_7, %4 : i32
      %c0_i32_8 = arith.constant 0 : i32
      %c0_i32_9 = arith.constant 0 : i32
      %c0_i32_10 = arith.constant 0 : i32
      %6 = tpu.memref_slice %arg2[%c0_i32_9, %c0_i32_10] : memref<164x32xf32, #tpu.memory_space<any>> -> memref<1x32xf32, #tpu.memory_space<any>>
      %c0_i32_11 = arith.constant 0 : i32
      %7 = tpu.memref_slice %arg3[%5, %c0_i32_11] : memref<16x32xf32, #tpu.memory_space<vmem>> -> memref<1x32xf32, #tpu.memory_space<vmem>>
      %8 = tpu.memref_slice %arg4[%c0_i32_8] : memref<1x!tpu.dma_semaphore, #tpu.memory_space<semaphore_mem>> -> memref<1x!tpu.dma_semaphore, #tpu.memory_space<semaphore_mem>>
      %9 = tpu.memref_squeeze %8 : memref<1x!tpu.dma_semaphore, #tpu.memory_space<semaphore_mem>> -> memref<!tpu.dma_semaphore, #tpu.memory_space<semaphore_mem>>
      tpu.wait_dma2 semaphore(%9 : memref<!tpu.dma_semaphore, #tpu.memory_space<semaphore_mem>>) src(%6 : memref<1x32xf32, #tpu.memory_space<any>>) dst(%7 : memref<1x32xf32, #tpu.memory_space<vmem>>)
    }
    %c16_i32_5 = arith.constant 16 : i32
    return
  }
  func.func @transform_1(%arg0: i32, %arg1: memref<16xi32, #tpu.memory_space<smem>>) -> (i32, i32) {
    %c0_i32 = arith.constant 0 : i32
    %c0_i32_0 = arith.constant 0 : i32
    return %arg0, %c0_i32 : i32, i32
  }
}

</mosaic_0001>

<llo_original>
// kernel: tpu_custom_call.1
$region0: #{tpu_custom_call.1}
  #allocation0 [shape = 'u32[]', space=smem, size = 0x4, offset = 0x4, fixed_abs, tag = 'smem constant byte address 0x4 - core index']
  #allocation1 [shape = 'u32[144,128]{1,0:T(1,128)}', space=vmem, size = 0x12000, scoped, tag = 'internal scratch']
  #allocation2 [shape = 's32[1]{0}', space=sflag, size = 0x4, scoped, tag = 'scratch operand']
  #allocation3 [shape = 's32[1]{0}', space=sflag, size = 0x4, scoped, tag = 'scoped memory for tpu_custom_call.1']
  #allocation4 [shape = 'u8[512]{0}', space=smem, size = 0x200, scoped, tag = 'prefetched SMEM operand 0']
  #allocation7 [shape = 's32[]', space=sflag, size = 0x4, offset = 0, fixed_abs, tag = 'sflag constant byte address 0x0 - dummy sync flag']
  %s0 = inlined_call_operand.vmem [shape: s32[16], index: 0, kind: input, shape index: {}]
  %s1 = inlined_call_operand.vmem [shape: f32[164,32], index: 1, kind: input, shape index: {}]
  %s2 = inlined_call_operand.hbm [shape: f32[16,32], index: 2, kind: output, shape index: {}]
  %s3 = sld [smem:[#allocation0]]
  $region54: #{tpu_custom_call.1} parent=0
    _
  %s5 = ssub.s32 1, %s3
  %s6 = scalar_select 0, %s5, %s3
  %s7 = sshll.u32 %s0, 4
  %s8 = int_to_ptr.vmem [resolvable:$true] %s7
  %10 = dma.vmem_to_smem %s8, 16, [#allocation4], [#allocation3]
  %11 = dma.done [#allocation3], 16
  %12 = sfence
  $region1: #{tpu_custom_call.1} parent=0
    #allocation5 [shape = 'u8[8192]{0}', space=vmem, size = 0x2000, scoped, tag = 'output window, operand 0, single buffered']
    #allocation6 [shape = 's32[1]{0}', space=sflag, size = 0x4, scoped, tag = 'scoped memory for tpu_custom_call.1']
    %13 = vsyncpa [#allocation6], 0
    %s14 = smul.u32 0, 16
    loop: start=0, step=1, limit=16
    $region2: #{tpu_custom_call.1} parent=1 // loop_pre_header
      _
    $region3: #{tpu_custom_call.1} parent=1 // loop_header
      %s16 = sphi 0, %s20
      %p17 = scmp.ge.s32.totalorder %s16, 16
    $region4: #{tpu_custom_call.1} parent=1 // loop_header_branch
      %19 = sbr.rel (%p17) target = $region8
    $region5: #{tpu_custom_call.1} parent=1 // loop_body
      %s21 = sadd.s32 %s14, %s16
      %s22 = sld [smem:[#allocation4 + %s21]]
      %s23 = scalar_lea.vmem %s1, %s22
      %s24 = scalar_lea.vmem [#allocation5], %s16
      %p26 = scmp.lt.u32.totalorder 1, 8
      %p27 = pneg %p26
      // Predicated region
      $region9: #{tpu_custom_call.1} parent=5 // pred_check
        _
      $region10: #{tpu_custom_call.1} parent=5 // pred_check_branch
        %29 = sbr.rel (%p26) target = $region12
      $region11: #{tpu_custom_call.1} parent=5 // pred_region
        %s44 = sand.u32 1, 7
        %p45 = scmp.eq.s32.totalorder %s44, 0
        %p46 = pneg %p45
        // Predicated region
        $region24: #{tpu_custom_call.1} parent=11 // pred_check
          _
        $region25: #{tpu_custom_call.1} parent=11 // pred_check_branch
          %48 = sbr.rel (%p45) target = $region27
        $region26: #{tpu_custom_call.1} parent=11 // pred_region
          %s49 = sand.u32 1, 7
          %s50 = ssub.s32 1, %s49
          %s51 = scalar_lea.vmem %s23, %s50
          %s52 = ssub.s32 1, %s49
          %s53 = scalar_lea.vmem %s24, %s52 [#allocation5]
          %s54 = sshllo.u32 0, %s49
          loop: start=0, step=1, limit=1
          $region28: #{tpu_custom_call.1} parent=26 // loop_pre_header
            _
          $region29: #{tpu_custom_call.1} parent=26 // loop_header
            %s56 = sphi 0, %s60
            %p57 = scmp.ge.s32.totalorder %s56, 1
            %s61 = sphi %s51, %s51
            %s62 = sphi %s53, %s53
          $region30: #{tpu_custom_call.1} parent=26 // loop_header_branch
            %59 = sbr.rel (%p57) target = $region34
          $region31: #{tpu_custom_call.1} parent=26 // loop_body
            %v63 = vld [vmem:[%s61] sm:%s54]
            %64 = vst [vmem:[%s62] sm:%s54] %v63
          $region32: #{tpu_custom_call.1} parent=26 // loop_footer
            %s60 = sadd.s32 1, %s56
          $region33: #{tpu_custom_call.1} parent=26 // loop_footer_branch
            %55 = sbr.rel target = $region29
          $region34: #{tpu_custom_call.1} parent=26 // loop_exit
            _
        $region27: #{tpu_custom_call.1} parent=11 // pred_fallthru
          _
      $region12: #{tpu_custom_call.1} parent=5 // pred_fallthru
        _
      // Predicated region
      $region13: #{tpu_custom_call.1} parent=5 // pred_check
        %p30 = pneg %p26
      $region14: #{tpu_custom_call.1} parent=5 // pred_check_branch
        %32 = sbr.rel (%p30) target = $region16
      $region15: #{tpu_custom_call.1} parent=5 // pred_region
        %s33 = sshllo.u32 0, 1
        loop: start=0, step=1, limit=1
        $region17: #{tpu_custom_call.1} parent=15 // loop_pre_header
          _
        $region18: #{tpu_custom_call.1} parent=15 // loop_header
          %s35 = sphi 0, %s39
          %p36 = scmp.ge.s32.totalorder %s35, 1
          %s40 = sphi %s23, %s23
          %s41 = sphi %s24, %s24
        $region19: #{tpu_custom_call.1} parent=15 // loop_header_branch
          %38 = sbr.rel (%p36) target = $region23
        $region20: #{tpu_custom_call.1} parent=15 // loop_body
          %v42 = vld [vmem:[%s40] sm:%s33]
          %43 = vst [vmem:[%s41] sm:%s33] %v42
        $region21: #{tpu_custom_call.1} parent=15 // loop_footer
          %s39 = sadd.s32 1, %s35
        $region22: #{tpu_custom_call.1} parent=15 // loop_footer_branch
          %34 = sbr.rel target = $region18
        $region23: #{tpu_custom_call.1} parent=15 // loop_exit
          _
      $region16: #{tpu_custom_call.1} parent=5 // pred_fallthru
        _
      // Predicated region
      $region35: #{tpu_custom_call.1} parent=5 // pred_check
        _
      $region36: #{tpu_custom_call.1} parent=5 // pred_check_branch
        %67 = sbr.rel (0) target = $region38
      $region37: #{tpu_custom_call.1} parent=5 // pred_region
        %68 = vsyncadd [#allocation2], 16
      $region38: #{tpu_custom_call.1} parent=5 // pred_fallthru
        _
    $region6: #{tpu_custom_call.1} parent=1 // loop_footer
      %s20 = sadd.s32 1, %s16
    $region7: #{tpu_custom_call.1} parent=1 // loop_footer_branch
      %15 = sbr.rel target = $region3
    $region8: #{tpu_custom_call.1} parent=1 // loop_exit
      _
    loop: start=0, step=1, limit=16
    $region39: #{tpu_custom_call.1} parent=1 // loop_pre_header
      _
    $region40: #{tpu_custom_call.1} parent=1 // loop_header
      %s70 = sphi 0, %s74
      %p71 = scmp.ge.s32.totalorder %s70, 16
    $region41: #{tpu_custom_call.1} parent=1 // loop_header_branch
      %73 = sbr.rel (%p71) target = $region45
    $region42: #{tpu_custom_call.1} parent=1 // loop_body
      %s75 = smul.u32 1, 1
      %s76 = sshll.u32 %s75, 4
      %77 = dma.done [#allocation2], %s76
    $region43: #{tpu_custom_call.1} parent=1 // loop_footer
      %s74 = sadd.s32 1, %s70
    $region44: #{tpu_custom_call.1} parent=1 // loop_footer_branch
      %69 = sbr.rel target = $region40
    $region45: #{tpu_custom_call.1} parent=1 // loop_exit
      _
    // Predicated region
    $region46: #{tpu_custom_call.1} parent=1 // pred_check
      _
    $region47: #{tpu_custom_call.1} parent=1 // pred_check_branch
      %79 = sbr.rel (0) target = $region49
    $region48: #{tpu_custom_call.1} parent=1 // pred_region
      %s81 = ssub.s32 256, 256
      %82 = vsyncadd [#allocation6], %s81
      %s83 = sshll.u32 [#allocation5], 4
      %s84 = int_to_ptr.vmem [resolvable:$true] %s83
      %89 = dma.vmem_to_hbm [thread:$0]  %s84, 256, %s2, [#allocation6], 128, 128, 8
    $region49: #{tpu_custom_call.1} parent=1 // pred_fallthru
      _
    // Predicated region
    $region50: #{tpu_custom_call.1} parent=1 // pred_check
      _
    $region51: #{tpu_custom_call.1} parent=1 // pred_check_branch
      %91 = sbr.rel (0) target = $region53
    $region52: #{tpu_custom_call.1} parent=1 // pred_region
      %92 = dma.done [#allocation6], 256
    $region53: #{tpu_custom_call.1} parent=1 // pred_fallthru
      _
    %93 = vsyncpa [#allocation6], 1
  %94 = vsyncmov [#allocation2]
  %s95 = vpop.sfrf %94
  %p96 = scmp.eq.s32.totalorder %s95, 0
  %p97 = pneg %p96
  %99 = shalt.err (%p97)

</llo_original>
